<compile_context>
chip_gen: v7x
topology: tpu7x:2x2x1
jax: 0.10.0
libtpu: 0.0.40
codegen_flags: <defaults>
</compile_context>

<pallas_src>
import jax
import jax.numpy as jnp
import numpy as np
from jax.experimental import pallas as pl
from jax.experimental.pallas import tpu as pltpu


def _patch_merging_kernel(x_ref, we_ref, wo_ref, bias_ref, o_ref):
    # x_ref   : (TR, 2, W2, 2C) tile; axis 1 = row parity,
    #           last dim = [col-even c | col-odd c]
    # we_ref  : (2C, 2Cout) gamma-folded weight rows for even-row chans [x0|x2]
    # wo_ref  : (2C, 2Cout) gamma-folded weight rows for odd-row chans  [x1|x3]
    # bias_ref: (1, 2Cout)  beta @ W^T (f32)
    # o_ref   : (TR, W2, 2Cout)
    tr, _, w2, c2 = x_ref.shape
    n_tok = tr * w2

    # Slice each row parity straight off the VMEM ref (no full-tile f32 copy),
    # then cast to f32 for the LayerNorm statistics.  The (TR,W2,2C)->(TR*W2,2C)
    # reshape is a free view whenever W2 is a sublane multiple (8 for f32).
    xe = x_ref[:, 0, :, :].astype(jnp.float32).reshape(n_tok, c2)   # [x0 | x2]
    xo = x_ref[:, 1, :, :].astype(jnp.float32).reshape(n_tok, c2)   # [x1 | x3]

    # LayerNorm over the full 4C channels (stats combined across both halves).
    inv_4c = 1.0 / (2.0 * c2)
    mean = (jnp.sum(xe, axis=-1, keepdims=True)
            + jnp.sum(xo, axis=-1, keepdims=True)) * inv_4c
    ce = xe - mean
    co = xo - mean
    var = (jnp.sum(ce * ce, axis=-1, keepdims=True)
           + jnp.sum(co * co, axis=-1, keepdims=True)) * inv_4c
    inv_std = jax.lax.rsqrt(var + 1e-5)

    # gamma already folded into we/wo; beta folded into bias.
    ye = (ce * inv_std).astype(we_ref.dtype)
    yo = (co * inv_std).astype(wo_ref.dtype)

    # Two K=2C MXU passes with f32 accumulate.  (On v5e at large C a single
    # K=4C dot over concat([ye, yo], -1) with stacked [we; wo] is preferable;
    # on v6e/v7x the kernel is HBM-bound and this is noise.)
    acc = jnp.dot(ye, we_ref[...], preferred_element_type=jnp.float32)
    acc = acc + jnp.dot(yo, wo_ref[...], preferred_element_type=jnp.float32)
    acc = acc + bias_ref[...]
    o_ref[...] = acc.reshape(tr, w2, -1).astype(o_ref.dtype)


def _vmem_capacity_bytes(default=64 << 20):
    """Physical VMEM per TensorCore; conservative 64 MiB fallback."""
    try:
        return int(pltpu.get_tpu_info().vmem_capacity_bytes)
    except Exception:   # older jax / query unavailable -> conservative default
        return default


def _pick_tile_rows(n_rows, w2, target_tokens, *, min_steps=4):
    """Largest divisor of n_rows with tile_rows*w2 <= target_tokens that keeps
    at least `min_steps` grid steps (>= 2 per v7x TensorCore), preferring an
    even step count so megacore halves stay balanced."""
    # TODO(synk): add a cdiv + masked-remainder path so awkward n_rows values
    # don't degenerate to tiny divisor tiles.
    cap = max(1, min(n_rows, target_tokens // max(w2, 1)))
    if n_rows >= min_steps:
        cap = min(cap, max(1, n_rows // min_steps))
    best, best_even = 1, None
    for t in range(1, cap + 1):
        if n_rows % t == 0:
            best = t
            if (n_rows // t) % 2 == 0:
                best_even = t
    if best_even is not None and 2 * best_even >= best:
        return best_even
    return best


def patch_merging(x, input_resolution, gamma, beta, weight, *,
                  compute_dtype=jnp.bfloat16, target_block_tokens=None):
    """JAX/Pallas equivalent of PatchMerging.forward.

    Args:
      x: (b, h*w, c) tokens.  Keep bf16 end-to-end if upstream is bf16; the
         kernel only upcasts per-slice for LayerNorm statistics.
      input_resolution: (h, w).
      gamma, beta: (4c,) LayerNorm affine parameters.
      weight: (2c, 4c) torch-layout Linear weight (out_features, in_features).
      compute_dtype: matmul input dtype (bf16 feeds the native MXU path).
      target_block_tokens: tokens per grid step; defaults to 1024 on
        128-MiB-VMEM chips (v5e/v6e), 512 otherwise (v7x).
    Returns:
      (b, h*w/4, 2c), dtype of x.
    """
    h, w = input_resolution
    b, seq_len, c = x.shape
    assert seq_len == h * w, "input feature has wrong size"
    assert h % 2 == 0 and w % 2 == 0, f"x size ({h}*{w}) are not even."
    h2, w2 = h // 2, w // 2
    c2_out = 2 * c
    n_rows = b * h2                   # merged-row (row-pair) count
    n_tokens = h2 * w2

    vmem_cap = _vmem_capacity_bytes()
    if target_block_tokens is None:
        target_block_tokens = 1024 if vmem_cap >= (96 << 20) else 512

    # Free, layout-preserving view (no gather, no HBM round trip):
    # (b, h, w, c) -> (R, 2, w2, 2c) with R = b*h/2.
    x4 = x.reshape(n_rows, 2, w2, 2 * c)

    # Fold gamma into the weight and beta into an output bias; split the
    # (4c, 2c) weight into even-row ([x0|x2]) and odd-row ([x1|x3]) halves.
    w_t = weight.T.astype(jnp.float32)                       # (4c, 2c)
    w_g = gamma.astype(jnp.float32)[:, None] * w_t
    w_even = jnp.concatenate([w_g[0:c], w_g[2 * c:3 * c]], axis=0).astype(compute_dtype)
    w_odd = jnp.concatenate([w_g[c:2 * c], w_g[3 * c:4 * c]], axis=0).astype(compute_dtype)
    bias = (beta.astype(jnp.float32) @ w_t).reshape(1, c2_out)

    tile_r = _pick_tile_rows(n_rows, w2, target_block_tokens)
    tile_tokens = tile_r * w2
    grid = (n_rows // tile_r,)

    # VMEM budget: double-buffered in/out tiles, (default double-buffered)
    # weights, plus the kernel's f32 temporaries; capped at ~3/4 of physical
    # VMEM (~48 MiB on v7x, ~96 MiB on v5e/v6e).
    in_b = np.dtype(x.dtype).itemsize
    cd_b = np.dtype(compute_dtype).itemsize
    x_tile = tile_r * 2 * w2 * 2 * c * in_b
    o_tile = tile_tokens * c2_out * in_b
    w_bytes = 2 * (2 * c) * c2_out * cd_b + c2_out * 4
    f32_tmp = 6 * tile_tokens * 2 * c * 4 + 2 * tile_tokens * c2_out * 4
    est = 2 * x_tile + 2 * o_tile + 2 * w_bytes + f32_tmp
    vmem_limit = int(min((vmem_cap * 3) // 4,
                         max(est * 3 // 2 + (2 << 20), 16 << 20)))

    m_total = n_rows * w2
    cost = pl.CostEstimate(
        flops=2 * m_total * (4 * c) * c2_out + 10 * m_total * (4 * c),
        transcendentals=m_total,
        bytes_accessed=(int(x.size) * in_b + m_total * c2_out * in_b
                        + 2 * (2 * c) * c2_out * cd_b + c2_out * 4),
    )

    out = pl.pallas_call(
        _patch_merging_kernel,
        out_shape=jax.ShapeDtypeStruct((n_rows, w2, c2_out), x.dtype),
        grid_spec=pltpu.PrefetchScalarGridSpec(
            num_scalar_prefetch=0,
            grid=grid,
            in_specs=[
                # Last two block dims equal the full array dims -> always legal
                # under the (8,128) rule, for any w2 / c.
                pl.BlockSpec((tile_r, 2, w2, 2 * c), lambda i: (i, 0, 0, 0)),
                # Grid-invariant operands: constant index_map -> the pipeline
                # issues their DMAs only once.  (pipeline_mode=pl.Buffered(1)
                # would also drop the second buffer; left at the portable
                # default here.)
                pl.BlockSpec((2 * c, c2_out), lambda i: (0, 0)),
                pl.BlockSpec((2 * c, c2_out), lambda i: (0, 0)),
                pl.BlockSpec((1, c2_out), lambda i: (0, 0)),
            ],
            out_specs=pl.BlockSpec((tile_r, w2, c2_out), lambda i: (i, 0, 0)),
        ),
        compiler_params=pltpu.CompilerParams(
            dimension_semantics=("parallel",),
            vmem_limit_bytes=vmem_limit,
        ),
        cost_estimate=cost,
    )(x4, w_even, w_odd, bias)

    # Free view back to the torch token layout.
    return out.reshape(b, n_tokens, c2_out)


def _reference(x, input_resolution, gamma, beta, weight):
    """Pure-JAX reference of the torch forward pass for correctness check."""
    h, w = input_resolution
    b, seq_len, c = x.shape
    xg = x.reshape(b, h, w, c)
    x0 = xg[:, 0::2, 0::2, :]
    x1 = xg[:, 1::2, 0::2, :]
    x2 = xg[:, 0::2, 1::2, :]
    x3 = xg[:, 1::2, 1::2, :]
    y = jnp.concatenate([x0, x1, x2, x3], axis=-1).reshape(b, -1, 4 * c)
    mean = jnp.mean(y, axis=-1, keepdims=True)
    var = jnp.mean((y - mean) ** 2, axis=-1, keepdims=True)
    yn = (y - mean) / jnp.sqrt(var + 1e-5)
    yn = yn * gamma + beta
    return yn @ weight.T


if __name__ == "__main__":
    key = jax.random.PRNGKey(0)
    k_x, k_w, k_g, k_b = jax.random.split(key, 4)

    # Small shapes consistent with the module: b=2, dim(c)=4, h=w=16.
    b, h, w, dim = 2, 16, 16, 4
    x = jax.random.normal(k_x, (b, h * w, dim), dtype=jnp.float32)

    # nn.Linear(4*dim, 2*dim, bias=False) weight and nn.LayerNorm(4*dim) params.
    weight = jax.random.normal(k_w, (2 * dim, 4 * dim), dtype=jnp.float32) * 0.1
    gamma = 1.0 + 0.1 * jax.random.normal(k_g, (4 * dim,), dtype=jnp.float32)
    beta = 0.1 * jax.random.normal(k_b, (4 * dim,), dtype=jnp.float32)

    ref = _reference(x, (h, w), gamma, beta, weight)

    # Exact path (f32 matmul) — tight tolerance.
    out_exact = jax.block_until_ready(
        patch_merging(x, (h, w), gamma, beta, weight, compute_dtype=jnp.float32))
    assert out_exact.shape == (b, (h // 2) * (w // 2), 2 * dim), out_exact.shape
    assert jnp.allclose(out_exact, ref, atol=1e-4, rtol=1e-4), "f32 mismatch vs reference"

    # Fast path (bf16 MXU inputs, f32 accumulate) — bf16-level tolerance.
    out_fast = jax.block_until_ready(patch_merging(x, (h, w), gamma, beta, weight))
    assert out_fast.shape == (b, (h // 2) * (w // 2), 2 * dim), out_fast.shape
    assert jnp.allclose(out_fast, ref, atol=5e-2, rtol=5e-2), "bf16 mismatch vs reference"

    print("KERNEL_OK")
</pallas_src>

<mosaic_0001>
module attributes {stable_mosaic.version = 11 : i64} {
  func.func @_patch_merging_kernel(%arg0: i32, %arg1: memref<4x2x8x8xf32, #tpu.memory_space<vmem>>, %arg2: memref<8x8xf32, #tpu.memory_space<vmem>>, %arg3: memref<8x8xf32, #tpu.memory_space<vmem>>, %arg4: memref<1x8xf32, #tpu.memory_space<vmem>>, %arg5: memref<4x8x8xf32, #tpu.memory_space<vmem>>) attributes {dimension_semantics = [#tpu.dimension_semantics<parallel>], iteration_bounds = array<i64: 4>, scalar_prefetch = 0 : i64, scratch_operands = 0 : i64, tpu.core_type = #tpu.core_type<tc>, window_params = [{transform_indices = @transform_0, window_bounds = array<i64: 4, 2, 8, 8>}, {pipeline_mode = #tpu.pipeline_mode<synchronous>, transform_indices = @transform_1, window_bounds = array<i64: 8, 8>}, {pipeline_mode = #tpu.pipeline_mode<synchronous>, transform_indices = @transform_2, window_bounds = array<i64: 8, 8>}, {pipeline_mode = #tpu.pipeline_mode<synchronous>, transform_indices = @transform_3, window_bounds = array<i64: 1, 8>}, {transform_indices = @transform_4, window_bounds = array<i64: 4, 8, 8>}]} {
    %c0 = arith.constant 0 : index
    %c0_0 = arith.constant 0 : index
    %c0_1 = arith.constant 0 : index
    %c0_2 = arith.constant 0 : index
    %0 = vector.load %arg1[%c0, %c0_0, %c0_1, %c0_2] : memref<4x2x8x8xf32, #tpu.memory_space<vmem>>, vector<4x1x8x8xf32>
    %1 = vector.shape_cast %0 : vector<4x1x8x8xf32> to vector<4x8x8xf32>
    %2 = vector.shape_cast %1 : vector<4x8x8xf32> to vector<32x8xf32>
    %c0_3 = arith.constant 0 : index
    %c1 = arith.constant 1 : index
    %c0_4 = arith.constant 0 : index
    %c0_5 = arith.constant 0 : index
    %3 = vector.load %arg1[%c0_3, %c1, %c0_4, %c0_5] : memref<4x2x8x8xf32, #tpu.memory_space<vmem>>, vector<4x1x8x8xf32>
    %4 = vector.shape_cast %3 : vector<4x1x8x8xf32> to vector<4x8x8xf32>
    %5 = vector.shape_cast %4 : vector<4x8x8xf32> to vector<32x8xf32>
    %cst = arith.constant dense<0.000000e+00> : vector<32xf32>
    %6 = vector.multi_reduction <add>, %2, %cst [1] : vector<32x8xf32> to vector<32xf32>
    %7 = vector.shape_cast %6 : vector<32xf32> to vector<32x1xf32>
    %cst_6 = arith.constant dense<0.000000e+00> : vector<32xf32>
    %8 = vector.multi_reduction <add>, %5, %cst_6 [1] : vector<32x8xf32> to vector<32xf32>
    %9 = vector.shape_cast %8 : vector<32xf32> to vector<32x1xf32>
    %10 = arith.addf %7, %9 : vector<32x1xf32>
    %cst_7 = arith.constant 6.250000e-02 : f32
    %11 = vector.broadcast %cst_7 : f32 to vector<32x1xf32>
    %12 = arith.mulf %10, %11 : vector<32x1xf32>
    %13 = vector.broadcast %12 : vector<32x1xf32> to vector<32x8xf32>
    %14 = arith.subf %2, %13 : vector<32x8xf32>
    %15 = vector.broadcast %12 : vector<32x1xf32> to vector<32x8xf32>
    %16 = arith.subf %5, %15 : vector<32x8xf32>
    %17 = arith.mulf %14, %14 : vector<32x8xf32>
    %cst_8 = arith.constant dense<0.000000e+00> : vector<32xf32>
    %18 = vector.multi_reduction <add>, %17, %cst_8 [1] : vector<32x8xf32> to vector<32xf32>
    %19 = vector.shape_cast %18 : vector<32xf32> to vector<32x1xf32>
    %20 = arith.mulf %16, %16 : vector<32x8xf32>
    %cst_9 = arith.constant dense<0.000000e+00> : vector<32xf32>
    %21 = vector.multi_reduction <add>, %20, %cst_9 [1] : vector<32x8xf32> to vector<32xf32>
    %22 = vector.shape_cast %21 : vector<32xf32> to vector<32x1xf32>
    %23 = arith.addf %19, %22 : vector<32x1xf32>
    %cst_10 = arith.constant 6.250000e-02 : f32
    %24 = vector.broadcast %cst_10 : f32 to vector<32x1xf32>
    %25 = arith.mulf %23, %24 : vector<32x1xf32>
    %cst_11 = arith.constant 9.99999974E-6 : f32
    %26 = vector.broadcast %cst_11 : f32 to vector<32x1xf32>
    %27 = arith.addf %25, %26 : vector<32x1xf32>
    %28 = math.rsqrt %27 : vector<32x1xf32>
    %29 = vector.broadcast %28 : vector<32x1xf32> to vector<32x8xf32>
    %30 = arith.mulf %14, %29 : vector<32x8xf32>
    %31 = vector.broadcast %28 : vector<32x1xf32> to vector<32x8xf32>
    %32 = arith.mulf %16, %31 : vector<32x8xf32>
    %c0_12 = arith.constant 0 : index
    %c0_13 = arith.constant 0 : index
    %33 = vector.load %arg2[%c0_12, %c0_13] : memref<8x8xf32, #tpu.memory_space<vmem>>, vector<8x8xf32>
    %cst_14 = arith.constant dense<0.000000e+00> : vector<32x8xf32>
    %34 = tpu.matmul %30, %33, %cst_14 {dimension_numbers = #tpu.dot_dimension_numbers<[1], [0], [0], [1], [0, 0, 1, 1], [], []>} : vector<32x8xf32>, vector<8x8xf32>, vector<32x8xf32> -> vector<32x8xf32>
    %c0_15 = arith.constant 0 : index
    %c0_16 = arith.constant 0 : index
    %35 = vector.load %arg3[%c0_15, %c0_16] : memref<8x8xf32, #tpu.memory_space<vmem>>, vector<8x8xf32>
    %cst_17 = arith.constant dense<0.000000e+00> : vector<32x8xf32>
    %36 = tpu.matmul %32, %35, %cst_17 {dimension_numbers = #tpu.dot_dimension_numbers<[1], [0], [0], [1], [0, 0, 1, 1], [], []>} : vector<32x8xf32>, vector<8x8xf32>, vector<32x8xf32> -> vector<32x8xf32>
    %37 = arith.addf %34, %36 : vector<32x8xf32>
    %c0_18 = arith.constant 0 : index
    %c0_19 = arith.constant 0 : index
    %38 = vector.load %arg4[%c0_18, %c0_19] : memref<1x8xf32, #tpu.memory_space<vmem>>, vector<1x8xf32>
    %39 = vector.broadcast %38 : vector<1x8xf32> to vector<32x8xf32>
    %40 = arith.addf %37, %39 : vector<32x8xf32>
    %41 = vector.shape_cast %40 : vector<32x8xf32> to vector<4x8x8xf32>
    %c0_20 = arith.constant 0 : index
    %c0_21 = arith.constant 0 : index
    %c0_22 = arith.constant 0 : index
    %42 = vector.load %arg5[%c0_20, %c0_21, %c0_22] : memref<4x8x8xf32, #tpu.memory_space<vmem>>, vector<4x8x8xf32>
    tpu.vector_store %arg5[%c0_20, %c0_21, %c0_22], %41 {strides = array<i32>} : memref<4x8x8xf32, #tpu.memory_space<vmem>>, vector<4x8x8xf32>,
    return
  }
  func.func @transform_0(%arg0: i32) -> (i32, i32, i32, i32) {
    %c0_i32 = arith.constant 0 : i32
    %c0_i32_0 = arith.constant 0 : i32
    %c0_i32_1 = arith.constant 0 : i32
    %c0_i32_2 = arith.constant 0 : i32
    return %arg0, %c0_i32, %c0_i32_0, %c0_i32_1 : i32, i32, i32, i32
  }
  func.func @transform_1(%arg0: i32) -> (i32, i32) {
    %c0_i32 = arith.constant 0 : i32
    %c0_i32_0 = arith.constant 0 : i32
    %c0_i32_1 = arith.constant 0 : i32
    return %c0_i32, %c0_i32_0 : i32, i32
  }
  func.func @transform_2(%arg0: i32) -> (i32, i32) {
    %c0_i32 = arith.constant 0 : i32
    %c0_i32_0 = arith.constant 0 : i32
    %c0_i32_1 = arith.constant 0 : i32
    return %c0_i32, %c0_i32_0 : i32, i32
  }
  func.func @transform_3(%arg0: i32) -> (i32, i32) {
    %c0_i32 = arith.constant 0 : i32
    %c0_i32_0 = arith.constant 0 : i32
    %c0_i32_1 = arith.constant 0 : i32
    return %c0_i32, %c0_i32_0 : i32, i32
  }
  func.func @transform_4(%arg0: i32) -> (i32, i32, i32) {
    %c0_i32 = arith.constant 0 : i32
    %c0_i32_0 = arith.constant 0 : i32
    %c0_i32_1 = arith.constant 0 : i32
    return %arg0, %c0_i32, %c0_i32_0 : i32, i32, i32
  }
}

</mosaic_0001>

<llo_original>
// kernel: tpu_custom_call.1
$region0: #{tpu_custom_call.1}
  #allocation0 [shape = 'u32[]', space=smem, size = 0x4, offset = 0x4, fixed_abs, tag = 'smem constant byte address 0x4 - core index']
  #allocation1 [shape = 'u32[144,128]{1,0:T(1,128)}', space=vmem, size = 0x12000, scoped, tag = 'internal scratch']
  %s0 = inlined_call_operand.vmem [shape: f32[16,2,8,8], index: 0, kind: input, shape index: {}]
  %s1 = inlined_call_operand.vmem [shape: f32[8,8], index: 1, kind: input, shape index: {}]
  %s2 = inlined_call_operand.vmem [shape: f32[8,8], index: 2, kind: input, shape index: {}]
  %s3 = inlined_call_operand.vmem [shape: f32[1,8], index: 3, kind: input, shape index: {}]
  %s4 = inlined_call_operand.vmem [shape: f32[16,8,8], index: 4, kind: output, shape index: {}]
  %s5 = sld [smem:[#allocation0]]
  $region49: #{tpu_custom_call.1} parent=0
    _
  %s7 = ssub.s32 1, %s5
  %s8 = scalar_select 0, %s7, %s5
  loop: start=0, step=1, limit=6
  $region2: #{tpu_custom_call.1} parent=0 // loop_pre_header
    _
  $region3: #{tpu_custom_call.1} parent=0 // loop_header
    %s10 = sphi 0, %s14
    %p11 = scmp.ge.s32.totalorder %s10, 6
    %s20 = sphi 0, %s22
    %s23 = sphi 0, %s20
    %s24 = sphi 0, %s23
    %s40 = sphi 0, %s24
    %s44 = sphi 0, %s44
    %s46 = sphi 0, %s44
    %s47 = sphi 0, %s46
    %s61 = sphi 0, %s47
    %s65 = sphi 0, %s65
    %s67 = sphi 0, %s65
    %s68 = sphi 0, %s67
    %s82 = sphi 0, %s68
    %s86 = sphi 0, %s86
    %s88 = sphi 0, %s86
    %s89 = sphi 0, %s88
    %s103 = sphi 0, %s89
    %s109 = sphi 0, %s111
    %s112 = sphi 0, %s109
    %s113 = sphi 0, %s112
    %s129 = sphi 0, %s113
  $region4: #{tpu_custom_call.1} parent=0 // loop_header_branch
    %13 = sbr.rel (%p11) target = $region8
  $region5: #{tpu_custom_call.1} parent=0 // loop_body
    %s15 = ssub.s32 %s10, 1
    %s16 = ssub.s32 %s10, 2
    %s17 = sadd.s32 %s10, 1
    %s18 = ssub.s32 %s10, %s17
    %p19 = scmp.eq.s32.totalorder %s18, 0
    %s21 = sadd.s32 %s20, 1
    %s22 = scalar_select %p19, %s20, %s21
    %p25 = pneg %p19
    %p26 = scmp.eq.s32.totalorder %s10, 3
    %p27 = por %p25, %p26
    %p28 = scmp.ne.s32.totalorder %s20, %s23
    %p29 = scmp.eq.s32.totalorder %s10, 0
    %p30 = por %p28, %p29
    %p31 = scmp.ne.s32.totalorder %s20, %s23
    %p32 = scmp.eq.s32.totalorder %s15, 3
    %p33 = por %p31, %p32
    %p34 = scmp.ne.s32.totalorder %s23, %s24
    %p35 = scmp.eq.s32.totalorder %s15, 0
    %p36 = por %p34, %p35
    %p37 = scmp.ne.s32.totalorder %s23, %s24
    %p38 = scmp.eq.s32.totalorder %s16, 3
    %p39 = por %p37, %p38
    %p41 = scmp.ne.s32.totalorder %s24, %s40
    %p42 = scmp.eq.s32.totalorder %s16, 0
    %p43 = por %p41, %p42
    %s45 = sadd.s32 %s44, 1
    %p48 = scmp.eq.s32.totalorder %s10, 3
    %p49 = scmp.ne.s32.totalorder %s44, %s46
    %p50 = scmp.eq.s32.totalorder %s10, 0
    %p51 = por %p49, %p50
    %p52 = scmp.ne.s32.totalorder %s44, %s46
    %p53 = scmp.eq.s32.totalorder %s15, 3
    %p54 = por %p52, %p53
    %p55 = scmp.ne.s32.totalorder %s46, %s47
    %p56 = scmp.eq.s32.totalorder %s15, 0
    %p57 = por %p55, %p56
    %p58 = scmp.ne.s32.totalorder %s46, %s47
    %p59 = scmp.eq.s32.totalorder %s16, 3
    %p60 = por %p58, %p59
    %p62 = scmp.ne.s32.totalorder %s47, %s61
    %p63 = scmp.eq.s32.totalorder %s16, 0
    %p64 = por %p62, %p63
    %s66 = sadd.s32 %s65, 1
    %p69 = scmp.eq.s32.totalorder %s10, 3
    %p70 = scmp.ne.s32.totalorder %s65, %s67
    %p71 = scmp.eq.s32.totalorder %s10, 0
    %p72 = por %p70, %p71
    %p73 = scmp.ne.s32.totalorder %s65, %s67
    %p74 = scmp.eq.s32.totalorder %s15, 3
    %p75 = por %p73, %p74
    %p76 = scmp.ne.s32.totalorder %s67, %s68
    %p77 = scmp.eq.s32.totalorder %s15, 0
    %p78 = por %p76, %p77
    %p79 = scmp.ne.s32.totalorder %s67, %s68
    %p80 = scmp.eq.s32.totalorder %s16, 3
    %p81 = por %p79, %p80
    %p83 = scmp.ne.s32.totalorder %s68, %s82
    %p84 = scmp.eq.s32.totalorder %s16, 0
    %p85 = por %p83, %p84
    %s87 = sadd.s32 %s86, 1
    %p90 = scmp.eq.s32.totalorder %s10, 3
    %p91 = scmp.ne.s32.totalorder %s86, %s88
    %p92 = scmp.eq.s32.totalorder %s10, 0
    %p93 = por %p91, %p92
    %p94 = scmp.ne.s32.totalorder %s86, %s88
    %p95 = scmp.eq.s32.totalorder %s15, 3
    %p96 = por %p94, %p95
    %p97 = scmp.ne.s32.totalorder %s88, %s89
    %p98 = scmp.eq.s32.totalorder %s15, 0
    %p99 = por %p97, %p98
    %p100 = scmp.ne.s32.totalorder %s88, %s89
    %p101 = scmp.eq.s32.totalorder %s16, 3
    %p102 = por %p100, %p101
    %p104 = scmp.ne.s32.totalorder %s89, %s103
    %p105 = scmp.eq.s32.totalorder %s16, 0
    %p106 = por %p104, %p105
    %s107 = ssub.s32 %s10, %s17
    %p108 = scmp.eq.s32.totalorder %s107, 0
    %s110 = sadd.s32 %s109, 1
    %s111 = scalar_select %p108, %s109, %s110
    %p114 = pneg %p108
    %p115 = scmp.eq.s32.totalorder %s10, 3
    %p116 = por %p114, %p115
    %p117 = scmp.ne.s32.totalorder %s109, %s112
    %p118 = scmp.eq.s32.totalorder %s10, 0
    %p119 = por %p117, %p118
    %p120 = scmp.ne.s32.totalorder %s109, %s112
    %p121 = scmp.eq.s32.totalorder %s15, 3
    %p122 = por %p120, %p121
    %p123 = scmp.ne.s32.totalorder %s112, %s113
    %p124 = scmp.eq.s32.totalorder %s15, 0
    %p125 = por %p123, %p124
    %p126 = scmp.ne.s32.totalorder %s112, %s113
    %p127 = scmp.eq.s32.totalorder %s16, 3
    %p128 = por %p126, %p127
    %p130 = scmp.ne.s32.totalorder %s113, %s129
    %p131 = scmp.eq.s32.totalorder %s16, 0
    %p132 = por %p130, %p131
    %p133 = scmp.le.s32.totalorder 1, %s10
    %p134 = scmp.lt.s32.totalorder %s10, 5
    %p135 = pnand %p133, %p134
    %p136 = pneg %p135
    // Predicated region
    $region9: #{tpu_custom_call.1} parent=5 // pred_check
      _
    $region10: #{tpu_custom_call.1} parent=5 // pred_check_branch
      %138 = sbr.rel (%p135) target = $region12
    $region11: #{tpu_custom_call.1} parent=5 // pred_region
      %s139 = ssub.s32 %s10, 1
      // Predicated region
      $region13: #{tpu_custom_call.1} parent=11 // pred_check
        %p140 = pneg %p57
      $region14: #{tpu_custom_call.1} parent=11 // pred_check_branch
        %142 = sbr.rel (%p140) target = $region16
      $region15: #{tpu_custom_call.1} parent=11 // pred_region
        _
      $region16: #{tpu_custom_call.1} parent=11 // pred_fallthru
        _
      // Predicated region
      $region17: #{tpu_custom_call.1} parent=11 // pred_check
        %p143 = pneg %p78
      $region18: #{tpu_custom_call.1} parent=11 // pred_check_branch
        %145 = sbr.rel (%p143) target = $region20
      $region19: #{tpu_custom_call.1} parent=11 // pred_region
        _
      $region20: #{tpu_custom_call.1} parent=11 // pred_fallthru
        _
      // Predicated region
      $region21: #{tpu_custom_call.1} parent=11 // pred_check
        %p146 = pneg %p99
      $region22: #{tpu_custom_call.1} parent=11 // pred_check_branch
        %148 = sbr.rel (%p146) target = $region24
      $region23: #{tpu_custom_call.1} parent=11 // pred_region
        _
      $region24: #{tpu_custom_call.1} parent=11 // pred_fallthru
        _
    $region12: #{tpu_custom_call.1} parent=5 // pred_fallthru
      _
    %p149 = scmp.lt.s32.totalorder %s10, 4
    // Predicated region
    $region25: #{tpu_custom_call.1} parent=5 // pred_check
      %p150 = pneg %p149
    $region26: #{tpu_custom_call.1} parent=5 // pred_check_branch
      %152 = sbr.rel (%p150) target = $region28
    $region27: #{tpu_custom_call.1} parent=5 // pred_region
      // Predicated region
      $region29: #{tpu_custom_call.1} parent=27 // pred_check
        %p153 = pneg %p30
      $region30: #{tpu_custom_call.1} parent=27 // pred_check_branch
        %155 = sbr.rel (%p153) target = $region32
      $region31: #{tpu_custom_call.1} parent=27 // pred_region
        %s156 = smul.u32 4, %s10
        %p157 = scmp.lt.s32.totalorder %s156, 15
        %s158 = scalar_select %p157, %s156, 15
        %s159 = smul.addr %s158, 2
        %s160 = smul.addr %s159, 8
        %s161 = scalar_lea.vmem %s0, %s160
        %s162 = smul.u32 4, %s10
      $region32: #{tpu_custom_call.1} parent=27 // pred_fallthru
        _
    $region28: #{tpu_custom_call.1} parent=5 // pred_fallthru
      _
    %p163 = scmp.le.s32.totalorder 1, %s10
    %p164 = scmp.lt.s32.totalorder %s10, 5
    %p165 = pnand %p163, %p164
    %p166 = pneg %p165
    // Predicated region
    $region33: #{tpu_custom_call.1} parent=5 // pred_check
      _
    $region34: #{tpu_custom_call.1} parent=5 // pred_check_branch
      %168 = sbr.rel (%p165) target = $region36
    $region35: #{tpu_custom_call.1} parent=5 // pred_region
      %s169 = ssub.s32 %s10, 1
      %s170 = smul.u32 4, %s15
      %p171 = scmp.lt.s32.totalorder %s170, 15
      %s172 = scalar_select %p171, %s170, 15
      %s173 = smul.addr %s172, 2
      %s174 = smul.addr %s173, 8
      %s175 = scalar_lea.vmem %s0, %s174
      %p176 = pneg %p36
      %p177 = pneg %p33
      %p178 = pneg %p57
      %p179 = pneg %p54
      %p180 = pneg %p78
      %p181 = pneg %p75
      %p182 = pneg %p99
      %p183 = pneg %p96
      %p184 = pneg %p125
      %p185 = pneg %p122
      %s186 = smul.u32 4, %s15
      %p187 = scmp.lt.s32.totalorder %s186, 15
      %s188 = scalar_select %p187, %s186, 15
      %s189 = smul.addr %s188, 8
      %s190 = scalar_lea.vmem %s4, %s189
      %s191 = smul.u32 4, %s15
      %p192 = scmp.lt.s32.totalorder %s191, 15
      %s193 = scalar_select %p192, %s191, 15
      %s194 = smul.addr %s193, 2
      %s195 = smul.addr %s194, 8
      %s196 = scalar_lea.vmem %s0, %s195
      %s197 = smul.u32 4, %s15
      %s198 = smul.u32 4, %s15
      %p199 = scmp.lt.s32.totalorder %s198, 15
      %s200 = scalar_select %p199, %s198, 15
      %s201 = smul.addr %s200, 8
      %s202 = scalar_lea.vmem %s4, %s201
      %s203 = smul.u32 4, %s15
      %v204 = vld [vmem:[%s196] sm:$0xff]
      %v205 = vld [vmem:[%s196 + $0x10] sm:$0xff]
      %v206 = vld [vmem:[%s196 + $0x20] sm:$0xff]
      %v207 = vld [vmem:[%s196 + $0x30] sm:$0xff]
      %s208 = scalar_lea.vmem %s196, 8
      %v209 = vld [vmem:[%s208] sm:$0xff]
      %v210 = vld [vmem:[%s208 + $0x10] sm:$0xff]
      %v211 = vld [vmem:[%s208 + $0x20] sm:$0xff]
      %v212 = vld [vmem:[%s208 + $0x30] sm:$0xff]
      %vm213 = vcmask 64512
      %v214 = vsel %vm213, %v204, 0.0
      %215 = vadd.xlane.f32.xlu0 %v214
      %v216 = vpop.xlane.xlu0 %215
      %v217 = vsel %vm213, %v205, 0.0
      %218 = vadd.xlane.f32.xlu0 %v217
      %v219 = vpop.xlane.xlu0 %218
      %v220 = vsel %vm213, %v206, 0.0
      %221 = vadd.xlane.f32.xlu0 %v220
      %v222 = vpop.xlane.xlu0 %221
      %v223 = vsel %vm213, %v207, 0.0
      %224 = vadd.xlane.f32.xlu0 %v223
      %v225 = vpop.xlane.xlu0 %224
      %v226 = vsel %vm213, %v209, 0.0
      %227 = vadd.xlane.f32.xlu0 %v226
      %v228 = vpop.xlane.xlu0 %227
      %v229 = vsel %vm213, %v210, 0.0
      %230 = vadd.xlane.f32.xlu0 %v229
      %v231 = vpop.xlane.xlu0 %230
      %v232 = vsel %vm213, %v211, 0.0
      %233 = vadd.xlane.f32.xlu0 %v232
      %v234 = vpop.xlane.xlu0 %233
      %v235 = vsel %vm213, %v212, 0.0
      %236 = vadd.xlane.f32.xlu0 %v235
      %v237 = vpop.xlane.xlu0 %236
      %v238 = vadd.f32 %v216, %v228
      %v239 = vadd.f32 %v219, %v231
      %v240 = vadd.f32 %v222, %v234
      %v241 = vadd.f32 %v225, %v237
      %v242 = vmul.f32 %v238, 0.0625
      %v243 = vmul.f32 %v239, 0.0625
      %v244 = vmul.f32 %v240, 0.0625
      %v245 = vmul.f32 %v241, 0.0625
      %v246 = vsub.f32 %v204, %v242
      %v247 = vsub.f32 %v205, %v243
      %v248 = vsub.f32 %v206, %v244
      %v249 = vsub.f32 %v207, %v245
      %v250 = vsub.f32 %v209, %v242
      %v251 = vsub.f32 %v210, %v243
      %v252 = vsub.f32 %v211, %v244
      %v253 = vsub.f32 %v212, %v245
      %v254 = vmul.f32 %v246, %v246
      %v255 = vmul.f32 %v247, %v247
      %v256 = vmul.f32 %v248, %v248
      %v257 = vmul.f32 %v249, %v249
      %v258 = vsel %vm213, %v254, 0.0
      %259 = vadd.xlane.f32.xlu0 %v258
      %v260 = vpop.xlane.xlu0 %259
      %v261 = vsel %vm213, %v255, 0.0
      %262 = vadd.xlane.f32.xlu0 %v261
      %v263 = vpop.xlane.xlu0 %262
      %v264 = vsel %vm213, %v256, 0.0
      %265 = vadd.xlane.f32.xlu0 %v264
      %v266 = vpop.xlane.xlu0 %265
      %v267 = vsel %vm213, %v257, 0.0
      %268 = vadd.xlane.f32.xlu0 %v267
      %v269 = vpop.xlane.xlu0 %268
      %v270 = vmul.f32 %v250, %v250
      %v271 = vmul.f32 %v251, %v251
      %v272 = vmul.f32 %v252, %v252
      %v273 = vmul.f32 %v253, %v253
      %v274 = vsel %vm213, %v270, 0.0
      %275 = vadd.xlane.f32.xlu0 %v274
      %v276 = vpop.xlane.xlu0 %275
      %v277 = vsel %vm213, %v271, 0.0
      %278 = vadd.xlane.f32.xlu0 %v277
      %v279 = vpop.xlane.xlu0 %278
      %v280 = vsel %vm213, %v272, 0.0
      %281 = vadd.xlane.f32.xlu0 %v280
      %v282 = vpop.xlane.xlu0 %281
      %v283 = vsel %vm213, %v273, 0.0
      %284 = vadd.xlane.f32.xlu0 %v283
      %v285 = vpop.xlane.xlu0 %284
      %v286 = vadd.f32 %v260, %v276
      %v287 = vadd.f32 %v263, %v279
      %v288 = vadd.f32 %v266, %v282
      %v289 = vadd.f32 %v269, %v285
      %v290 = vmul.f32 %v286, 0.0625
      %v291 = vmul.f32 %v287, 0.0625
      %v292 = vmul.f32 %v288, 0.0625
      %v293 = vmul.f32 %v289, 0.0625
      %v294 = vadd.f32 %v290, 1e-05
      %v295 = vadd.f32 %v291, 1e-05
      %v296 = vadd.f32 %v292, 1e-05
      %v297 = vadd.f32 %v293, 1e-05
      %v298 = vrsqrt.pop %v294
      %v299 = vrsqrt.pop %v295
      %v300 = vrsqrt.pop %v296
      %v301 = vrsqrt.pop %v297
      %v302 = vmul.f32 %v246, %v298
      %v303 = vmul.f32 %v247, %v299
      %v304 = vmul.f32 %v248, %v300
      %v305 = vmul.f32 %v249, %v301
      %v306 = vmul.f32 %v250, %v298
      %v307 = vmul.f32 %v251, %v299
      %v308 = vmul.f32 %v252, %v300
      %v309 = vmul.f32 %v253, %v301
      %v310 = vld [vmem:[%s1] sm:$0xff]
      %v311 = vld [vmem:[%s2] sm:$0xff]
      %v313 = vsel %vm213, %v306, 0
      %v316 = vsel %vm213, %v307, 0
      %v319 = vsel %vm213, %v308, 0
      %v322 = vsel %vm213, %v309, 0
      %324 = vmatprep.subr.mxu0 0.0
      %325 = vmatpush1.msra.mxu0 %v311
      %326 = vmatprep.subr.mxu0 0.0
      %327 = vmatpush1.msra.mxu0 0.0
      %328 = vmatprep.subr.mxu0 0.0
      %329 = vmatpush1.msra.mxu0 0.0
      %330 = vmatprep.subr.mxu0 0.0
      %331 = vmatpush1.msra.mxu0 0.0
      %332 = vmatprep.subr.mxu0 0.0
      %333 = vmatpush1.msra.mxu0 0.0
      %334 = vmatprep.subr.mxu0 0.0
      %335 = vmatpush1.msra.mxu0 0.0
      %336 = vmatprep.subr.mxu0 0.0
      %337 = vmatpush1.msra.mxu0 0.0
      %338 = vmatprep.subr.mxu0 0.0
      %339 = vmatpush1.msra.mxu0 0.0
      %340 = vmatprep.subr.mxu0 0.0
      %341 = vmatpush1.msra.mxu0 0.0
      %342 = vmatprep.subr.mxu0 0.0
      %343 = vmatpush1.msra.mxu0 0.0
      %344 = vmatprep.subr.mxu0 0.0
      %345 = vmatpush1.msra.mxu0 0.0
      %346 = vmatprep.subr.mxu0 0.0
      %347 = vmatpush1.msra.mxu0 0.0
      %348 = vmatprep.subr.mxu0 0.0
      %349 = vmatpush1.msra.mxu0 0.0
      %350 = vmatprep.subr.mxu0 0.0
      %351 = vmatpush1.msra.mxu0 0.0
      %352 = vmatprep.subr.mxu0 0.0
      %353 = vmatpush1.msra.mxu0 0.0
      %354 = vmatprep.subr.mxu0 0.0
      %355 = vmatpush1.msra.mxu0 0.0
      %356 = vmatprep.subr.mxu0 0.0
      %357 = vmatpush1.msra.mxu0 0.0
      %358 = vmatprep.subr.mxu0 0.0
      %359 = vmatpush1.msra.mxu0 0.0
      %360 = vmatprep.subr.mxu0 0.0
      %361 = vmatpush1.msra.mxu0 0.0
      %362 = vmatprep.subr.mxu0 0.0
      %363 = vmatpush1.msra.mxu0 0.0
      %364 = vmatprep.subr.mxu0 0.0
      %365 = vmatpush1.msra.mxu0 0.0
      %366 = vmatprep.subr.mxu0 0.0
      %367 = vmatpush1.msra.mxu0 0.0
      %368 = vmatprep.subr.mxu0 0.0
      %369 = vmatpush1.msra.mxu0 0.0
      %370 = vmatprep.subr.mxu0 0.0
      %371 = vmatpush1.msra.mxu0 0.0
      %372 = vmatprep.subr.mxu0 0.0
      %373 = vmatpush1.msra.mxu0 0.0
      %374 = vmatprep.subr.mxu0 0.0
      %375 = vmatpush1.msra.mxu0 0.0
      %376 = vmatprep.subr.mxu0 0.0
      %377 = vmatpush1.msra.mxu0 0.0
      %378 = vmatprep.subr.mxu0 0.0
      %379 = vmatpush1.msra.mxu0 0.0
      %380 = vmatprep.subr.mxu0 0.0
      %381 = vmatpush1.msra.mxu0 0.0
      %382 = vmatprep.subr.mxu0 0.0
      %383 = vmatpush1.msra.mxu0 0.0
      %384 = vmatprep.subr.mxu0 0.0
      %385 = vmatpush1.msra.mxu0 0.0
      %386 = vmatprep.subr.mxu0 0.0
      %387 = vmatpush1.msra.mxu0 0.0
      %388 = vmatprep.mubr.f32.mxu0 0.0
      %389 = vmatmul.mubr.f32.gmra.mrb[0].mxu0 %v313
      %v390 = vpop.f32.mrb[0].mxu0
      %v391 = vadd.f32 0.0, %v390
      %v392 = vpop.f32.mrb[0].mxu0
      %393 = vmatprep.mubr.f32.mxu0 0.0
      %394 = vmatmul.mubr.f32.gmra.mrb[0].mxu0 %v316
      %v395 = vpop.f32.mrb[0].mxu0
      %v396 = vadd.f32 0.0, %v395
      %v397 = vpop.f32.mrb[0].mxu0
      %398 = vmatprep.mubr.f32.mxu0 0.0
      %399 = vmatmul.mubr.f32.gmra.mrb[0].mxu0 %v319
      %v400 = vpop.f32.mrb[0].mxu0
      %v401 = vadd.f32 0.0, %v400
      %v402 = vpop.f32.mrb[0].mxu0
      %403 = vmatprep.mubr.f32.mxu0 0.0
      %404 = vmatmul.mubr.f32.gmra.mrb[0].mxu0 %v322
      %v405 = vpop.f32.mrb[0].mxu0
      %v406 = vadd.f32 0.0, %v405
      %v407 = vpop.f32.mrb[0].mxu0
      %408 = vdwg.mxu0
      %v410 = vsel %vm213, %v302, 0
      %v413 = vsel %vm213, %v303, 0
      %v416 = vsel %vm213, %v304, 0
      %v419 = vsel %vm213, %v305, 0
      %421 = vmatprep.subr.mxu0 0.0
      %422 = vmatpush1.msra.mxu0 %v310
      %423 = vmatprep.subr.mxu0 0.0
      %424 = vmatpush1.msra.mxu0 0.0
      %425 = vmatprep.subr.mxu0 0.0
      %426 = vmatpush1.msra.mxu0 0.0
      %427 = vmatprep.subr.mxu0 0.0
      %428 = vmatpush1.msra.mxu0 0.0
      %429 = vmatprep.subr.mxu0 0.0
      %430 = vmatpush1.msra.mxu0 0.0
      %431 = vmatprep.subr.mxu0 0.0
      %432 = vmatpush1.msra.mxu0 0.0
      %433 = vmatprep.subr.mxu0 0.0
      %434 = vmatpush1.msra.mxu0 0.0
      %435 = vmatprep.subr.mxu0 0.0
      %436 = vmatpush1.msra.mxu0 0.0
      %437 = vmatprep.subr.mxu0 0.0
      %438 = vmatpush1.msra.mxu0 0.0
      %439 = vmatprep.subr.mxu0 0.0
      %440 = vmatpush1.msra.mxu0 0.0
      %441 = vmatprep.subr.mxu0 0.0
      %442 = vmatpush1.msra.mxu0 0.0
      %443 = vmatprep.subr.mxu0 0.0
      %444 = vmatpush1.msra.mxu0 0.0
      %445 = vmatprep.subr.mxu0 0.0
      %446 = vmatpush1.msra.mxu0 0.0
      %447 = vmatprep.subr.mxu0 0.0
      %448 = vmatpush1.msra.mxu0 0.0
      %449 = vmatprep.subr.mxu0 0.0
      %450 = vmatpush1.msra.mxu0 0.0
      %451 = vmatprep.subr.mxu0 0.0
      %452 = vmatpush1.msra.mxu0 0.0
      %453 = vmatprep.subr.mxu0 0.0
      %454 = vmatpush1.msra.mxu0 0.0
      %455 = vmatprep.subr.mxu0 0.0
      %456 = vmatpush1.msra.mxu0 0.0
      %457 = vmatprep.subr.mxu0 0.0
      %458 = vmatpush1.msra.mxu0 0.0
      %459 = vmatprep.subr.mxu0 0.0
      %460 = vmatpush1.msra.mxu0 0.0
      %461 = vmatprep.subr.mxu0 0.0
      %462 = vmatpush1.msra.mxu0 0.0
      %463 = vmatprep.subr.mxu0 0.0
      %464 = vmatpush1.msra.mxu0 0.0
      %465 = vmatprep.subr.mxu0 0.0
      %466 = vmatpush1.msra.mxu0 0.0
      %467 = vmatprep.subr.mxu0 0.0
      %468 = vmatpush1.msra.mxu0 0.0
      %469 = vmatprep.subr.mxu0 0.0
      %470 = vmatpush1.msra.mxu0 0.0
      %471 = vmatprep.subr.mxu0 0.0
      %472 = vmatpush1.msra.mxu0 0.0
      %473 = vmatprep.subr.mxu0 0.0
      %474 = vmatpush1.msra.mxu0 0.0
      %475 = vmatprep.subr.mxu0 0.0
      %476 = vmatpush1.msra.mxu0 0.0
      %477 = vmatprep.subr.mxu0 0.0
      %478 = vmatpush1.msra.mxu0 0.0
      %479 = vmatprep.subr.mxu0 0.0
      %480 = vmatpush1.msra.mxu0 0.0
      %481 = vmatprep.subr.mxu0 0.0
      %482 = vmatpush1.msra.mxu0 0.0
      %483 = vmatprep.subr.mxu0 0.0
      %484 = vmatpush1.msra.mxu0 0.0
      %485 = vmatprep.mubr.f32.mxu0 0.0
      %486 = vmatmul.mubr.f32.gmra.mrb[0].mxu0 %v410
      %v487 = vpop.f32.mrb[0].mxu0
      %v488 = vadd.f32 %v391, %v487
      %v489 = vpop.f32.mrb[0].mxu0
      %490 = vmatprep.mubr.f32.mxu0 0.0
      %491 = vmatmul.mubr.f32.gmra.mrb[0].mxu0 %v413
      %v492 = vpop.f32.mrb[0].mxu0
      %v493 = vadd.f32 %v396, %v492
      %v494 = vpop.f32.mrb[0].mxu0
      %495 = vmatprep.mubr.f32.mxu0 0.0
      %496 = vmatmul.mubr.f32.gmra.mrb[0].mxu0 %v416
      %v497 = vpop.f32.mrb[0].mxu0
      %v498 = vadd.f32 %v401, %v497
      %v499 = vpop.f32.mrb[0].mxu0
      %500 = vmatprep.mubr.f32.mxu0 0.0
      %501 = vmatmul.mubr.f32.gmra.mrb[0].mxu0 %v419
      %v502 = vpop.f32.mrb[0].mxu0
      %v503 = vadd.f32 %v406, %v502
      %v504 = vpop.f32.mrb[0].mxu0
      %505 = vdwg.mxu0
      %v506 = vld [vmem:[%s3] sm:$0x1]
      %v508 = vlaneseq
      %v509 = vshrl.u32 %v508, 7
      %v510 = vsub.s32 0, %v509
      %v511 = vrot.slane %v506, %v510
      %v513 = vadd.f32 %v488, %v511
      %v514 = vadd.f32 %v493, %v511
      %v515 = vadd.f32 %v498, %v511
      %v516 = vadd.f32 %v503, %v511
      %517 = vst.msk [vmem:[%s202] sm:$0xff] %vm213, %v513
      %518 = vst.msk [vmem:[%s202 + $0x8] sm:$0xff] %vm213, %v514
      %519 = vst.msk [vmem:[%s202 + $0x10] sm:$0xff] %vm213, %v515
      %520 = vst.msk [vmem:[%s202 + $0x18] sm:$0xff] %vm213, %v516
      %s521 = smul.u32 4, %s15
      %p522 = scmp.lt.s32.totalorder %s521, 15
      %s523 = scalar_select %p522, %s521, 15
      %s524 = smul.addr %s523, 8
      %s525 = scalar_lea.vmem %s4, %s524
      // Predicated region
      $region37: #{tpu_custom_call.1} parent=35 // pred_check
        %p526 = pneg %p122
      $region38: #{tpu_custom_call.1} parent=35 // pred_check_branch
        %528 = sbr.rel (%p526) target = $region40
      $region39: #{tpu_custom_call.1} parent=35 // pred_region
        %s529 = smul.u32 4, %s15
      $region40: #{tpu_custom_call.1} parent=35 // pred_fallthru
        _
    $region36: #{tpu_custom_call.1} parent=5 // pred_fallthru
      _
    %p530 = scmp.le.s32.totalorder 2, %s10
    // Predicated region
    $region41: #{tpu_custom_call.1} parent=5 // pred_check
      %p531 = pneg %p530
    $region42: #{tpu_custom_call.1} parent=5 // pred_check_branch
      %533 = sbr.rel (%p531) target = $region44
    $region43: #{tpu_custom_call.1} parent=5 // pred_region
      %s534 = ssub.s32 %s10, 2
      // Predicated region
      $region45: #{tpu_custom_call.1} parent=43 // pred_check
        %p535 = pneg %p128
      $region46: #{tpu_custom_call.1} parent=43 // pred_check_branch
        %537 = sbr.rel (%p535) target = $region48
      $region47: #{tpu_custom_call.1} parent=43 // pred_region
        %s538 = smul.u32 4, %s16
        %p539 = scmp.lt.s32.totalorder %s538, 15
        %s540 = scalar_select %p539, %s538, 15
        %s541 = smul.addr %s540, 8
        %s542 = scalar_lea.vmem %s4, %s541
      $region48: #{tpu_custom_call.1} parent=43 // pred_fallthru
        _
    $region44: #{tpu_custom_call.1} parent=5 // pred_fallthru
      _
  $region6: #{tpu_custom_call.1} parent=0 // loop_footer
    %s14 = sadd.s32 1, %s10
  $region7: #{tpu_custom_call.1} parent=0 // loop_footer_branch
    %9 = sbr.rel target = $region3
  $region8: #{tpu_custom_call.1} parent=0 // loop_exit
    _

</llo_original>
